<compile_context>
chip_gen: v7x
topology: tpu7x:2x2x1
jax: 0.10.0
libtpu: 0.0.40
codegen_flags: <defaults>
</compile_context>

<pallas_src>
import functools
import math

import jax
import jax.numpy as jnp
from jax.experimental import pallas as pl
from jax.experimental.pallas import tpu as pltpu

NEG_SLOPE = 0.01  # F.leaky_relu default


def _leaky(h):
    # One VPU max instead of cmp+select.
    return jnp.maximum(h, NEG_SLOPE * h)


def _pick_tile(dim, cap, align):
    """Largest tile <= cap that divides dim and is a multiple of align.

    If dim <= cap (or no aligned divisor exists) return dim: a full-extent
    block is always a legal BlockSpec dimension.
    """
    if dim <= cap:
        return dim
    t = (cap // align) * align
    while t >= align:
        if dim % t == 0:
            return t
        t -= align
    return dim


def _sublane(dtype):
    # 8 sublanes of 32 bits; sub-32-bit dtypes pack along sublanes.
    return 8 * max(4 // jnp.dtype(dtype).itemsize, 1)


# -----------------------------------------------------------------------------
# Fused whole-MLP kernel: weights resident in VMEM, activations never hit HBM
# between layers.  Grid is over the batch (M) dimension only.
# -----------------------------------------------------------------------------
def _fused_mlp_kernel(*refs, num_layers):
    x_ref = refs[0]
    w_refs = refs[1:1 + num_layers]
    o_ref = refs[1 + num_layers]

    a = x_ref[...]
    for w_ref in w_refs:
        h = jnp.dot(a.astype(w_ref.dtype), w_ref[...],
                    preferred_element_type=jnp.float32)
        a = _leaky(h)                       # kept in f32 between layers
    o_ref[...] = a.astype(o_ref.dtype)


def mlp_forward_fused(x, params):
    """y = leaky(...leaky(x @ W0) @ W1 ...), all layers in one pallas_call."""
    M, K0 = x.shape
    n_layers = len(params)
    n_out = params[-1].shape[1]
    widths = [K0] + [w.shape[1] for w in params]

    tm = _pick_tile(M, 256, _sublane(x.dtype))
    grid = (M // tm,)

    in_specs = [pl.BlockSpec((tm, K0), lambda i: (i, 0))]
    for w in params:
        kin, kout = w.shape
        in_specs.append(pl.BlockSpec((kin, kout), lambda i: (0, 0)))

    itm = jnp.dtype(x.dtype).itemsize
    w_bytes = sum(w.size * jnp.dtype(w.dtype).itemsize for w in params)
    est = (2 * tm * K0 * itm            # double-buffered x tile
           + 2 * tm * n_out * itm       # double-buffered out tile
           + w_bytes                    # all weights (resident)
           + 2 * tm * max(widths) * 4)  # f32 intermediates
    vmem_limit = min(max(int(1.5 * est), 16 << 20), 64 << 20)

    return pl.pallas_call(
        functools.partial(_fused_mlp_kernel, num_layers=n_layers),
        out_shape=jax.ShapeDtypeStruct((M, n_out), x.dtype),
        grid_spec=pltpu.PrefetchScalarGridSpec(
            num_scalar_prefetch=0,
            grid=grid,
            in_specs=in_specs,
            out_specs=pl.BlockSpec((tm, n_out), lambda i: (i, 0)),
        ),
        compiler_params=pltpu.CompilerParams(
            dimension_semantics=("parallel",),
            vmem_limit_bytes=vmem_limit,
        ),
    )(x, *params)


# -----------------------------------------------------------------------------
# Tiled per-layer fallback for layers too large to keep resident in VMEM.
# -----------------------------------------------------------------------------
def _linear_leaky_noacc_kernel(x_ref, wt_ref, o_ref):
    # K fits in one block: no accumulator scratch, no pl.when branches.
    h = jnp.dot(x_ref[...], wt_ref[...], preferred_element_type=jnp.float32)
    o_ref[...] = _leaky(h).astype(o_ref.dtype)


def _linear_leaky_acc_kernel(x_ref, wt_ref, o_ref, acc_ref):
    k = pl.program_id(2)

    @pl.when(k == 0)
    def _():
        acc_ref[...] = jnp.zeros_like(acc_ref)

    acc_ref[...] += jnp.dot(x_ref[...], wt_ref[...],
                            preferred_element_type=jnp.float32)

    @pl.when(k == pl.num_programs(2) - 1)
    def _():
        o_ref[...] = _leaky(acc_ref[...]).astype(o_ref.dtype)


def linear_leaky_relu(x, w_t, *, tm=None, tn=None, tk=None):
    """y = leaky_relu(x @ w_t); x: [M, K], w_t: [K, N] (pre-transposed)."""
    M, K = x.shape
    K2, N = w_t.shape
    assert K == K2, (K, K2)

    tm = tm or _pick_tile(M, 256, _sublane(x.dtype))
    tn = tn or _pick_tile(N, 256, 128)
    tk = tk or _pick_tile(K, 512, 128)
    assert M % tm == 0 and N % tn == 0 and K % tk == 0

    itm = jnp.dtype(x.dtype).itemsize
    est = 2 * (tm * tk + tk * tn + tm * tn) * itm + tm * tn * 4
    vmem_limit = min(max(int(1.5 * est), 16 << 20), 64 << 20)

    if K == tk:
        grid = (M // tm, N // tn)
        in_specs = [pl.BlockSpec((tm, tk), lambda i, j: (i, 0)),
                    pl.BlockSpec((tk, tn), lambda i, j: (0, j))]
        out_spec = pl.BlockSpec((tm, tn), lambda i, j: (i, j))
        kernel = _linear_leaky_noacc_kernel
        scratch = []
        sem = ("parallel", "parallel")
    else:
        grid = (M // tm, N // tn, K // tk)
        in_specs = [pl.BlockSpec((tm, tk), lambda i, j, k: (i, k)),
                    pl.BlockSpec((tk, tn), lambda i, j, k: (k, j))]
        out_spec = pl.BlockSpec((tm, tn), lambda i, j, k: (i, j))
        kernel = _linear_leaky_acc_kernel
        scratch = [pltpu.VMEM((tm, tn), jnp.float32)]
        sem = ("parallel", "parallel", "arbitrary")

    return pl.pallas_call(
        kernel,
        out_shape=jax.ShapeDtypeStruct((M, N), x.dtype),
        grid_spec=pltpu.PrefetchScalarGridSpec(
            num_scalar_prefetch=0,
            grid=grid,
            in_specs=in_specs,
            out_specs=out_spec,
            scratch_shapes=scratch,
        ),
        compiler_params=pltpu.CompilerParams(
            dimension_semantics=sem,
            vmem_limit_bytes=vmem_limit,
        ),
    )(x, w_t)


# -----------------------------------------------------------------------------
# Module-level forward
# -----------------------------------------------------------------------------
def _fused_fits(x, params, budget_bytes=12 << 20):
    M, K0 = x.shape
    tm = _pick_tile(M, 256, _sublane(x.dtype))
    widths = [K0] + [w.shape[1] for w in params]
    itm = jnp.dtype(x.dtype).itemsize
    w_bytes = sum(w.size * jnp.dtype(w.dtype).itemsize for w in params)
    act_bytes = (2 * tm * K0 * itm + 2 * tm * widths[-1] * itm
                 + 2 * tm * max(widths) * 4)
    return (w_bytes + act_bytes) <= budget_bytes


@functools.partial(jax.jit, static_argnames=("fuse",))
def mlp_forward(x, params, fuse=None):
    orig_shape = x.shape
    x2 = x.reshape(-1, orig_shape[-1])
    if fuse is None:
        fuse = _fused_fits(x2, params)
    if fuse:
        y = mlp_forward_fused(x2, params)
    else:
        y = x2
        for w_t in params:
            y = linear_leaky_relu(y, w_t)
    return y.reshape(*orig_shape[:-1], y.shape[-1])


def init_mlp_params(key, dims, dtype=jnp.float32):
    """Mirrors nn.Linear(dims[i-1], dims[i], bias=False); stored as [in, out]."""
    params = []
    for i in range(1, len(dims)):
        key, sub = jax.random.split(key)
        fan_in, fan_out = dims[i - 1], dims[i]
        bound = 1.0 / math.sqrt(fan_in)
        w = jax.random.uniform(sub, (fan_out, fan_in), dtype=jnp.float32,
                               minval=-bound, maxval=bound)
        params.append(w.T.astype(dtype))
    return params


def mlp_reference(x, params, layerwise_dtype=None):
    """Pure-JAX reference.  layerwise_dtype mirrors the per-layer cast the
    tiled fallback performs when storing intermediates (e.g. bf16)."""
    a = x.astype(jnp.float32)
    for w in params:
        h = jnp.dot(a.astype(w.dtype), w, preferred_element_type=jnp.float32)
        a = _leaky(h)
        if layerwise_dtype is not None:
            a = a.astype(layerwise_dtype).astype(jnp.float32)
    return a.astype(x.dtype)


if __name__ == "__main__":
    key = jax.random.PRNGKey(0)
    k_x1, k_p1, k_x2, k_p2 = jax.random.split(key, 4)

    # ---- Test 1: tiny spec-sized MLP, f32, fully-fused single kernel -------
    batch = 8
    dims = [32, 64, 48, 16]
    x1 = jax.random.normal(k_x1, (batch, dims[0]), dtype=jnp.float32)
    p1 = init_mlp_params(k_p1, dims, dtype=jnp.float32)

    out1 = jax.block_until_ready(mlp_forward(x1, p1))
    ref1 = mlp_reference(x1, p1)
    assert out1.shape == (batch, dims[-1]), out1.shape
    assert jnp.allclose(out1, ref1, atol=1e-5, rtol=1e-5), "fused f32 mismatch"

    # ---- Test 2: realistic widths, bf16 weights/activations, fused path ----
    batch2 = 256
    dims2 = [512, 1024, 512, 256]
    x2 = jax.random.normal(k_x2, (batch2, dims2[0]),
                           dtype=jnp.float32).astype(jnp.bfloat16)
    p2 = init_mlp_params(k_p2, dims2, dtype=jnp.bfloat16)

    out2 = jax.block_until_ready(mlp_forward(x2, p2))
    ref2 = mlp_reference(x2, p2)
    assert jnp.allclose(out2.astype(jnp.float32), ref2.astype(jnp.float32),
                        atol=2e-2, rtol=2e-2), "fused bf16 mismatch"

    # ---- Test 3: same problem through the tiled per-layer fallback ---------
    out3 = jax.block_until_ready(mlp_forward(x2, p2, fuse=False))
    ref3 = mlp_reference(x2, p2, layerwise_dtype=jnp.bfloat16)
    assert jnp.allclose(out3.astype(jnp.float32), ref3.astype(jnp.float32),
                        atol=2e-2, rtol=2e-2), "tiled bf16 mismatch"

    print("KERNEL_OK")
</pallas_src>

<mosaic_0001>
module attributes {stable_mosaic.version = 11 : i64} {
  func.func @_fused_mlp_kernel(%arg0: i32, %arg1: memref<8x32xf32, #tpu.memory_space<vmem>>, %arg2: memref<32x64xf32, #tpu.memory_space<vmem>>, %arg3: memref<64x48xf32, #tpu.memory_space<vmem>>, %arg4: memref<48x16xf32, #tpu.memory_space<vmem>>, %arg5: memref<8x16xf32, #tpu.memory_space<vmem>>) attributes {dimension_semantics = [#tpu.dimension_semantics<parallel>], iteration_bounds = array<i64: 1>, scalar_prefetch = 0 : i64, scratch_operands = 0 : i64, tpu.core_type = #tpu.core_type<tc>, window_params = [{transform_indices = @transform_0, window_bounds = array<i64: 8, 32>}, {pipeline_mode = #tpu.pipeline_mode<synchronous>, transform_indices = @transform_1, window_bounds = array<i64: 32, 64>}, {pipeline_mode = #tpu.pipeline_mode<synchronous>, transform_indices = @transform_2, window_bounds = array<i64: 64, 48>}, {pipeline_mode = #tpu.pipeline_mode<synchronous>, transform_indices = @transform_3, window_bounds = array<i64: 48, 16>}, {transform_indices = @transform_4, window_bounds = array<i64: 8, 16>}]} {
    %c0 = arith.constant 0 : index
    %c0_0 = arith.constant 0 : index
    %0 = vector.load %arg1[%c0, %c0_0] : memref<8x32xf32, #tpu.memory_space<vmem>>, vector<8x32xf32>
    %c0_1 = arith.constant 0 : index
    %c0_2 = arith.constant 0 : index
    %1 = vector.load %arg2[%c0_1, %c0_2] : memref<32x64xf32, #tpu.memory_space<vmem>>, vector<32x64xf32>
    %cst = arith.constant dense<0.000000e+00> : vector<8x64xf32>
    %2 = tpu.matmul %0, %1, %cst {dimension_numbers = #tpu.dot_dimension_numbers<[1], [0], [0], [1], [0, 0, 1, 1], [], []>} : vector<8x32xf32>, vector<32x64xf32>, vector<8x64xf32> -> vector<8x64xf32>
    %cst_3 = arith.constant 0.00999999977 : f32
    %3 = vector.broadcast %cst_3 : f32 to vector<8x64xf32>
    %4 = arith.mulf %3, %2 : vector<8x64xf32>
    %5 = arith.maximumf %2, %4 : vector<8x64xf32>
    %c0_4 = arith.constant 0 : index
    %c0_5 = arith.constant 0 : index
    %6 = vector.load %arg3[%c0_4, %c0_5] : memref<64x48xf32, #tpu.memory_space<vmem>>, vector<64x48xf32>
    %cst_6 = arith.constant dense<0.000000e+00> : vector<8x48xf32>
    %7 = tpu.matmul %5, %6, %cst_6 {dimension_numbers = #tpu.dot_dimension_numbers<[1], [0], [0], [1], [0, 0, 1, 1], [], []>} : vector<8x64xf32>, vector<64x48xf32>, vector<8x48xf32> -> vector<8x48xf32>
    %cst_7 = arith.constant 0.00999999977 : f32
    %8 = vector.broadcast %cst_7 : f32 to vector<8x48xf32>
    %9 = arith.mulf %8, %7 : vector<8x48xf32>
    %10 = arith.maximumf %7, %9 : vector<8x48xf32>
    %c0_8 = arith.constant 0 : index
    %c0_9 = arith.constant 0 : index
    %11 = vector.load %arg4[%c0_8, %c0_9] : memref<48x16xf32, #tpu.memory_space<vmem>>, vector<48x16xf32>
    %cst_10 = arith.constant dense<0.000000e+00> : vector<8x16xf32>
    %12 = tpu.matmul %10, %11, %cst_10 {dimension_numbers = #tpu.dot_dimension_numbers<[1], [0], [0], [1], [0, 0, 1, 1], [], []>} : vector<8x48xf32>, vector<48x16xf32>, vector<8x16xf32> -> vector<8x16xf32>
    %cst_11 = arith.constant 0.00999999977 : f32
    %13 = vector.broadcast %cst_11 : f32 to vector<8x16xf32>
    %14 = arith.mulf %13, %12 : vector<8x16xf32>
    %15 = arith.maximumf %12, %14 : vector<8x16xf32>
    %c0_12 = arith.constant 0 : index
    %c0_13 = arith.constant 0 : index
    %16 = vector.load %arg5[%c0_12, %c0_13] : memref<8x16xf32, #tpu.memory_space<vmem>>, vector<8x16xf32>
    tpu.vector_store %arg5[%c0_12, %c0_13], %15 {strides = array<i32>} : memref<8x16xf32, #tpu.memory_space<vmem>>, vector<8x16xf32>,
    return
  }
  func.func @transform_0(%arg0: i32) -> (i32, i32) {
    %c0_i32 = arith.constant 0 : i32
    %c0_i32_0 = arith.constant 0 : i32
    return %arg0, %c0_i32 : i32, i32
  }
  func.func @transform_1(%arg0: i32) -> (i32, i32) {
    %c0_i32 = arith.constant 0 : i32
    %c0_i32_0 = arith.constant 0 : i32
    %c0_i32_1 = arith.constant 0 : i32
    return %c0_i32, %c0_i32_0 : i32, i32
  }
  func.func @transform_2(%arg0: i32) -> (i32, i32) {
    %c0_i32 = arith.constant 0 : i32
    %c0_i32_0 = arith.constant 0 : i32
    %c0_i32_1 = arith.constant 0 : i32
    return %c0_i32, %c0_i32_0 : i32, i32
  }
  func.func @transform_3(%arg0: i32) -> (i32, i32) {
    %c0_i32 = arith.constant 0 : i32
    %c0_i32_0 = arith.constant 0 : i32
    %c0_i32_1 = arith.constant 0 : i32
    return %c0_i32, %c0_i32_0 : i32, i32
  }
  func.func @transform_4(%arg0: i32) -> (i32, i32) {
    %c0_i32 = arith.constant 0 : i32
    %c0_i32_0 = arith.constant 0 : i32
    return %arg0, %c0_i32 : i32, i32
  }
}

</mosaic_0001>

<llo_original>
// kernel: mlp_forward.1
$region0: #{mlp_forward.1}
  #allocation0 [shape = 'u32[]', space=smem, size = 0x4, offset = 0x4, fixed_abs, tag = 'smem constant byte address 0x4 - core index']
  #allocation1 [shape = 'u32[144,128]{1,0:T(1,128)}', space=vmem, size = 0x12000, scoped, tag = 'internal scratch']
  %s0 = inlined_call_operand.vmem [shape: f32[8,32], index: 0, kind: input, shape index: {}]
  %s1 = inlined_call_operand.vmem [shape: f32[32,64], index: 1, kind: input, shape index: {}]
  %s2 = inlined_call_operand.vmem [shape: f32[64,48], index: 2, kind: input, shape index: {}]
  %s3 = inlined_call_operand.vmem [shape: f32[48,16], index: 3, kind: input, shape index: {}]
  %s4 = inlined_call_operand.hbm [shape: f32[8,16], index: 4, kind: output, shape index: {}]
  %s5 = sld [smem:[#allocation0]]
  $region26: #{mlp_forward.1} parent=0
    _
  %s7 = ssub.s32 1, %s5
  %s8 = scalar_select 0, %s7, %s5
  $region1: #{mlp_forward.1} parent=0
    #allocation2 [shape = 'u8[4096]{0}', space=vmem, size = 0x1000, scoped, tag = 'output window, operand 0, single buffered']
    #allocation3 [shape = 's32[1]{0}', space=sflag, size = 0x4, scoped, tag = 'scoped memory for mlp_forward.1']
    %9 = vsyncpa [#allocation3], 0
    // Predicated region
    $region2: #{mlp_forward.1} parent=1 // pred_check
      _
    $region3: #{mlp_forward.1} parent=1 // pred_check_branch
      %11 = sbr.rel (0) target = $region5
    $region4: #{mlp_forward.1} parent=1 // pred_region
      _
    $region5: #{mlp_forward.1} parent=1 // pred_fallthru
      _
    // Predicated region
    $region6: #{mlp_forward.1} parent=1 // pred_check
      _
    $region7: #{mlp_forward.1} parent=1 // pred_check_branch
      %13 = sbr.rel (0) target = $region9
    $region8: #{mlp_forward.1} parent=1 // pred_region
      _
    $region9: #{mlp_forward.1} parent=1 // pred_fallthru
      _
    // Predicated region
    $region10: #{mlp_forward.1} parent=1 // pred_check
      _
    $region11: #{mlp_forward.1} parent=1 // pred_check_branch
      %15 = sbr.rel (0) target = $region13
    $region12: #{mlp_forward.1} parent=1 // pred_region
      _
    $region13: #{mlp_forward.1} parent=1 // pred_fallthru
      _
    // Predicated region
    $region14: #{mlp_forward.1} parent=1 // pred_check
      _
    $region15: #{mlp_forward.1} parent=1 // pred_check_branch
      %17 = sbr.rel (0) target = $region17
    $region16: #{mlp_forward.1} parent=1 // pred_region
      _
    $region17: #{mlp_forward.1} parent=1 // pred_fallthru
      _
    %v18 = vld [vmem:[%s0] sm:$0xff]
    %v19 = vld [vmem:[%s1] sm:$0xff]
    %v20 = vld [vmem:[%s1 + $0x8] sm:$0xff]
    %v21 = vld [vmem:[%s1 + $0x10] sm:$0xff]
    %v22 = vld [vmem:[%s1 + $0x18] sm:$0xff]
    %vm23 = vcmask 261120
    %v25 = vsel %vm23, %v18, 0
    %27 = vmatprep.subr.mxu0 0.0
    %28 = vmatpush1.msra.mxu0 %v19
    %29 = vmatprep.subr.mxu0 0.0
    %30 = vmatpush1.msra.mxu0 %v20
    %31 = vmatprep.subr.mxu0 0.0
    %32 = vmatpush1.msra.mxu0 %v21
    %33 = vmatprep.subr.mxu0 0.0
    %34 = vmatpush1.msra.mxu0 %v22
    %35 = vmatprep.subr.mxu0 0.0
    %36 = vmatpush1.msra.mxu0 0.0
    %37 = vmatprep.subr.mxu0 0.0
    %38 = vmatpush1.msra.mxu0 0.0
    %39 = vmatprep.subr.mxu0 0.0
    %40 = vmatpush1.msra.mxu0 0.0
    %41 = vmatprep.subr.mxu0 0.0
    %42 = vmatpush1.msra.mxu0 0.0
    %43 = vmatprep.subr.mxu0 0.0
    %44 = vmatpush1.msra.mxu0 0.0
    %45 = vmatprep.subr.mxu0 0.0
    %46 = vmatpush1.msra.mxu0 0.0
    %47 = vmatprep.subr.mxu0 0.0
    %48 = vmatpush1.msra.mxu0 0.0
    %49 = vmatprep.subr.mxu0 0.0
    %50 = vmatpush1.msra.mxu0 0.0
    %51 = vmatprep.subr.mxu0 0.0
    %52 = vmatpush1.msra.mxu0 0.0
    %53 = vmatprep.subr.mxu0 0.0
    %54 = vmatpush1.msra.mxu0 0.0
    %55 = vmatprep.subr.mxu0 0.0
    %56 = vmatpush1.msra.mxu0 0.0
    %57 = vmatprep.subr.mxu0 0.0
    %58 = vmatpush1.msra.mxu0 0.0
    %59 = vmatprep.subr.mxu0 0.0
    %60 = vmatpush1.msra.mxu0 0.0
    %61 = vmatprep.subr.mxu0 0.0
    %62 = vmatpush1.msra.mxu0 0.0
    %63 = vmatprep.subr.mxu0 0.0
    %64 = vmatpush1.msra.mxu0 0.0
    %65 = vmatprep.subr.mxu0 0.0
    %66 = vmatpush1.msra.mxu0 0.0
    %67 = vmatprep.subr.mxu0 0.0
    %68 = vmatpush1.msra.mxu0 0.0
    %69 = vmatprep.subr.mxu0 0.0
    %70 = vmatpush1.msra.mxu0 0.0
    %71 = vmatprep.subr.mxu0 0.0
    %72 = vmatpush1.msra.mxu0 0.0
    %73 = vmatprep.subr.mxu0 0.0
    %74 = vmatpush1.msra.mxu0 0.0
    %75 = vmatprep.subr.mxu0 0.0
    %76 = vmatpush1.msra.mxu0 0.0
    %77 = vmatprep.subr.mxu0 0.0
    %78 = vmatpush1.msra.mxu0 0.0
    %79 = vmatprep.subr.mxu0 0.0
    %80 = vmatpush1.msra.mxu0 0.0
    %81 = vmatprep.subr.mxu0 0.0
    %82 = vmatpush1.msra.mxu0 0.0
    %83 = vmatprep.subr.mxu0 0.0
    %84 = vmatpush1.msra.mxu0 0.0
    %85 = vmatprep.subr.mxu0 0.0
    %86 = vmatpush1.msra.mxu0 0.0
    %87 = vmatprep.subr.mxu0 0.0
    %88 = vmatpush1.msra.mxu0 0.0
    %89 = vmatprep.subr.mxu0 0.0
    %90 = vmatpush1.msra.mxu0 0.0
    %91 = vmatprep.mubr.f32.mxu0 0.0
    %92 = vmatmul.mubr.f32.gmra.mrb[0].mxu0 %v25
    %v93 = vpop.f32.mrb[0].mxu0
    %v94 = vadd.f32 0.0, %v93
    %v95 = vpop.f32.mrb[0].mxu0
    %96 = vdwg.mxu0
    %v97 = vmul.f32 %v94, 0.01
    %v98 = vmax.f32 %v94, %v97
    %v99 = vld [vmem:[%s2] sm:$0xff]
    %v100 = vld [vmem:[%s2 + $0x8] sm:$0xff]
    %v101 = vld [vmem:[%s2 + $0x10] sm:$0xff]
    %v102 = vld [vmem:[%s2 + $0x18] sm:$0xff]
    %v103 = vld [vmem:[%s2 + $0x20] sm:$0xff]
    %v104 = vld [vmem:[%s2 + $0x28] sm:$0xff]
    %v105 = vld [vmem:[%s2 + $0x30] sm:$0xff]
    %v106 = vld [vmem:[%s2 + $0x38] sm:$0xff]
    %vm107 = vcmask 523264
    %v109 = vsel %vm107, %v98, 0
    %111 = vmatprep.subr.mxu0 0.0
    %112 = vmatpush1.msra.mxu0 %v99
    %113 = vmatprep.subr.mxu0 0.0
    %114 = vmatpush1.msra.mxu0 %v100
    %115 = vmatprep.subr.mxu0 0.0
    %116 = vmatpush1.msra.mxu0 %v101
    %117 = vmatprep.subr.mxu0 0.0
    %118 = vmatpush1.msra.mxu0 %v102
    %119 = vmatprep.subr.mxu0 0.0
    %120 = vmatpush1.msra.mxu0 %v103
    %121 = vmatprep.subr.mxu0 0.0
    %122 = vmatpush1.msra.mxu0 %v104
    %123 = vmatprep.subr.mxu0 0.0
    %124 = vmatpush1.msra.mxu0 %v105
    %125 = vmatprep.subr.mxu0 0.0
    %126 = vmatpush1.msra.mxu0 %v106
    %127 = vmatprep.subr.mxu0 0.0
    %128 = vmatpush1.msra.mxu0 0.0
    %129 = vmatprep.subr.mxu0 0.0
    %130 = vmatpush1.msra.mxu0 0.0
    %131 = vmatprep.subr.mxu0 0.0
    %132 = vmatpush1.msra.mxu0 0.0
    %133 = vmatprep.subr.mxu0 0.0
    %134 = vmatpush1.msra.mxu0 0.0
    %135 = vmatprep.subr.mxu0 0.0
    %136 = vmatpush1.msra.mxu0 0.0
    %137 = vmatprep.subr.mxu0 0.0
    %138 = vmatpush1.msra.mxu0 0.0
    %139 = vmatprep.subr.mxu0 0.0
    %140 = vmatpush1.msra.mxu0 0.0
    %141 = vmatprep.subr.mxu0 0.0
    %142 = vmatpush1.msra.mxu0 0.0
    %143 = vmatprep.subr.mxu0 0.0
    %144 = vmatpush1.msra.mxu0 0.0
    %145 = vmatprep.subr.mxu0 0.0
    %146 = vmatpush1.msra.mxu0 0.0
    %147 = vmatprep.subr.mxu0 0.0
    %148 = vmatpush1.msra.mxu0 0.0
    %149 = vmatprep.subr.mxu0 0.0
    %150 = vmatpush1.msra.mxu0 0.0
    %151 = vmatprep.subr.mxu0 0.0
    %152 = vmatpush1.msra.mxu0 0.0
    %153 = vmatprep.subr.mxu0 0.0
    %154 = vmatpush1.msra.mxu0 0.0
    %155 = vmatprep.subr.mxu0 0.0
    %156 = vmatpush1.msra.mxu0 0.0
    %157 = vmatprep.subr.mxu0 0.0
    %158 = vmatpush1.msra.mxu0 0.0
    %159 = vmatprep.subr.mxu0 0.0
    %160 = vmatpush1.msra.mxu0 0.0
    %161 = vmatprep.subr.mxu0 0.0
    %162 = vmatpush1.msra.mxu0 0.0
    %163 = vmatprep.subr.mxu0 0.0
    %164 = vmatpush1.msra.mxu0 0.0
    %165 = vmatprep.subr.mxu0 0.0
    %166 = vmatpush1.msra.mxu0 0.0
    %167 = vmatprep.subr.mxu0 0.0
    %168 = vmatpush1.msra.mxu0 0.0
    %169 = vmatprep.subr.mxu0 0.0
    %170 = vmatpush1.msra.mxu0 0.0
    %171 = vmatprep.subr.mxu0 0.0
    %172 = vmatpush1.msra.mxu0 0.0
    %173 = vmatprep.subr.mxu0 0.0
    %174 = vmatpush1.msra.mxu0 0.0
    %175 = vmatprep.mubr.f32.mxu0 0.0
    %176 = vmatmul.mubr.f32.gmra.mrb[0].mxu0 %v109
    %v177 = vpop.f32.mrb[0].mxu0
    %v178 = vadd.f32 0.0, %v177
    %v179 = vpop.f32.mrb[0].mxu0
    %180 = vdwg.mxu0
    %v181 = vmul.f32 %v178, 0.01
    %v182 = vmax.f32 %v178, %v181
    %v183 = vld [vmem:[%s3] sm:$0xff]
    %v184 = vld [vmem:[%s3 + $0x8] sm:$0xff]
    %v185 = vld [vmem:[%s3 + $0x10] sm:$0xff]
    %v186 = vld [vmem:[%s3 + $0x18] sm:$0xff]
    %v187 = vld [vmem:[%s3 + $0x20] sm:$0xff]
    %v188 = vld [vmem:[%s3 + $0x28] sm:$0xff]
    %vm189 = vcmask 392192
    %v191 = vsel %vm189, %v182, 0
    %193 = vmatprep.subr.mxu0 0.0
    %194 = vmatpush1.msra.mxu0 %v183
    %195 = vmatprep.subr.mxu0 0.0
    %196 = vmatpush1.msra.mxu0 %v184
    %197 = vmatprep.subr.mxu0 0.0
    %198 = vmatpush1.msra.mxu0 %v185
    %199 = vmatprep.subr.mxu0 0.0
    %200 = vmatpush1.msra.mxu0 %v186
    %201 = vmatprep.subr.mxu0 0.0
    %202 = vmatpush1.msra.mxu0 %v187
    %203 = vmatprep.subr.mxu0 0.0
    %204 = vmatpush1.msra.mxu0 %v188
    %205 = vmatprep.subr.mxu0 0.0
    %206 = vmatpush1.msra.mxu0 0.0
    %207 = vmatprep.subr.mxu0 0.0
    %208 = vmatpush1.msra.mxu0 0.0
    %209 = vmatprep.subr.mxu0 0.0
    %210 = vmatpush1.msra.mxu0 0.0
    %211 = vmatprep.subr.mxu0 0.0
    %212 = vmatpush1.msra.mxu0 0.0
    %213 = vmatprep.subr.mxu0 0.0
    %214 = vmatpush1.msra.mxu0 0.0
    %215 = vmatprep.subr.mxu0 0.0
    %216 = vmatpush1.msra.mxu0 0.0
    %217 = vmatprep.subr.mxu0 0.0
    %218 = vmatpush1.msra.mxu0 0.0
    %219 = vmatprep.subr.mxu0 0.0
    %220 = vmatpush1.msra.mxu0 0.0
    %221 = vmatprep.subr.mxu0 0.0
    %222 = vmatpush1.msra.mxu0 0.0
    %223 = vmatprep.subr.mxu0 0.0
    %224 = vmatpush1.msra.mxu0 0.0
    %225 = vmatprep.subr.mxu0 0.0
    %226 = vmatpush1.msra.mxu0 0.0
    %227 = vmatprep.subr.mxu0 0.0
    %228 = vmatpush1.msra.mxu0 0.0
    %229 = vmatprep.subr.mxu0 0.0
    %230 = vmatpush1.msra.mxu0 0.0
    %231 = vmatprep.subr.mxu0 0.0
    %232 = vmatpush1.msra.mxu0 0.0
    %233 = vmatprep.subr.mxu0 0.0
    %234 = vmatpush1.msra.mxu0 0.0
    %235 = vmatprep.subr.mxu0 0.0
    %236 = vmatpush1.msra.mxu0 0.0
    %237 = vmatprep.subr.mxu0 0.0
    %238 = vmatpush1.msra.mxu0 0.0
    %239 = vmatprep.subr.mxu0 0.0
    %240 = vmatpush1.msra.mxu0 0.0
    %241 = vmatprep.subr.mxu0 0.0
    %242 = vmatpush1.msra.mxu0 0.0
    %243 = vmatprep.subr.mxu0 0.0
    %244 = vmatpush1.msra.mxu0 0.0
    %245 = vmatprep.subr.mxu0 0.0
    %246 = vmatpush1.msra.mxu0 0.0
    %247 = vmatprep.subr.mxu0 0.0
    %248 = vmatpush1.msra.mxu0 0.0
    %249 = vmatprep.subr.mxu0 0.0
    %250 = vmatpush1.msra.mxu0 0.0
    %251 = vmatprep.subr.mxu0 0.0
    %252 = vmatpush1.msra.mxu0 0.0
    %253 = vmatprep.subr.mxu0 0.0
    %254 = vmatpush1.msra.mxu0 0.0
    %255 = vmatprep.subr.mxu0 0.0
    %256 = vmatpush1.msra.mxu0 0.0
    %257 = vmatprep.mubr.f32.mxu0 0.0
    %258 = vmatmul.mubr.f32.gmra.mrb[0].mxu0 %v191
    %v259 = vpop.f32.mrb[0].mxu0
    %v260 = vadd.f32 0.0, %v259
    %v261 = vpop.f32.mrb[0].mxu0
    %262 = vdwg.mxu0
    %v263 = vmul.f32 %v260, 0.01
    %v264 = vmax.f32 %v260, %v263
    %vm265 = vcmask 130048
    %266 = vst.msk [vmem:[#allocation2] sm:$0xff] %vm265, %v264
    // Predicated region
    $region18: #{mlp_forward.1} parent=1 // pred_check
      _
    $region19: #{mlp_forward.1} parent=1 // pred_check_branch
      %268 = sbr.rel (0) target = $region21
    $region20: #{mlp_forward.1} parent=1 // pred_region
      %s270 = ssub.s32 128, 128
      %271 = vsyncadd [#allocation3], %s270
      %s273 = sshll.u32 [#allocation2], 4
      %s274 = int_to_ptr.vmem [resolvable:$true] %s273
      %276 = dma.vmem_to_hbm [thread:$0]  %s274, 128, %s4, [#allocation3]
    $region21: #{mlp_forward.1} parent=1 // pred_fallthru
      _
    // Predicated region
    $region22: #{mlp_forward.1} parent=1 // pred_check
      _
    $region23: #{mlp_forward.1} parent=1 // pred_check_branch
      %278 = sbr.rel (0) target = $region25
    $region24: #{mlp_forward.1} parent=1 // pred_region
      %279 = dma.done [#allocation3], 128
    $region25: #{mlp_forward.1} parent=1 // pred_fallthru
      _
    %280 = vsyncpa [#allocation3], 1

</llo_original>
